<compile_context>
chip_gen: v6e
topology: v6e:2x2x1
jax: 0.10.0
libtpu: 0.0.40
codegen_flags: <defaults>
</compile_context>

<pallas_src>
import jax
import jax.numpy as jnp
from jax.experimental import pallas as pl
from jax.experimental.pallas import tpu as pltpu

NUM_SPLITS = 2  # outer "parallel" grid axis; keeps both TCs busy on v7x, cheap on 1-TC chips


def _round_up(a, b):
    return (a + b - 1) // b * b


def _weighted_ce_partial_kernel(x_ref, t_ref, out_ref, acc_ref):
    """One (C, TILE_N) tile of samples.

    x_ref:   (C, TILE_N)  logits (any float dtype, cast to f32 here)
    t_ref:   (1, TILE_N)  int32 targets (-1 marks padding)
    out_ref: (4, 1)       per-split partials [sum0, sum1, cnt0, cnt1]
    acc_ref: (4, TILE_N)  lane-wise running partials across the inner axis
    """
    i = pl.program_id(1)

    @pl.when(i == 0)
    def _init():
        acc_ref[...] = jnp.zeros_like(acc_ref)

    x = x_ref[...].astype(jnp.float32)   # (C, T) cast after DMA (bf16 ok in HBM)
    t = t_ref[...]                       # (1, T)

    # Per-sample cross entropy: lse(x) - x[target], reduced over the class
    # (sublane) axis so all 128 lanes stay busy.
    m = jnp.max(x, axis=0, keepdims=True)                                  # (1, T)
    lse = m + jnp.log(jnp.sum(jnp.exp(x - m), axis=0, keepdims=True))      # (1, T)
    cls = jax.lax.broadcasted_iota(jnp.int32, x.shape, 0)                  # (C, T)
    picked = jnp.sum(jnp.where(cls == t, x, 0.0), axis=0, keepdims=True)   # (1, T)
    losses = lse - picked                                                  # (1, T)

    # Class masks: padding (t == -1) and out-of-range targets drop out of both
    # groups, matching the PyTorch module's indexing behavior.
    mask0 = (t == 0).astype(jnp.float32)
    mask1 = (t == 1).astype(jnp.float32)

    acc_ref[...] += jnp.concatenate(
        [losses * mask0, losses * mask1, mask0, mask1], axis=0)            # (4, T)

    @pl.when(i == pl.num_programs(1) - 1)
    def _finalize():
        # Single cross-lane reduce per split, off the per-tile hot path.
        out_ref[...] = jnp.sum(acc_ref[...], axis=1, keepdims=True)        # (4, 1)


def weighted_cross_entropy(inputs, targets, *, tile_n=None):
    """inputs: (N, C) float logits (f32 or bf16), targets: (N,) ints in {0, 1}."""
    n, c = inputs.shape

    if tile_n is None:
        # Keep each (double-buffered) logits block around ~4 MiB so tiles fit
        # comfortably on v7x (64 MiB VMEM) as well as v5e/v6e.
        c_sub = _round_up(max(c, 8), 8)
        bytes_per_col = c_sub * jnp.dtype(inputs.dtype).itemsize
        tile_n = (4 * 1024 * 1024) // bytes_per_col
        tile_n = max(128, min(2048, (tile_n // 128) * 128))
    tile_n = min(tile_n, _round_up(n, 128))

    n_pad = _round_up(n, NUM_SPLITS * tile_n)
    inner = n_pad // (NUM_SPLITS * tile_n)

    # Lane-dense layout: classes on sublanes, samples on the 128-lane axis.
    x = jnp.pad(inputs.T, ((0, 0), (0, n_pad - n)))
    t2d = jnp.pad(targets.astype(jnp.int32), (0, n_pad - n),
                  constant_values=-1).reshape(1, n_pad)

    partials = pl.pallas_call(
        _weighted_ce_partial_kernel,
        out_shape=jax.ShapeDtypeStruct((NUM_SPLITS, 4, 1), jnp.float32),
        grid=(NUM_SPLITS, inner),
        in_specs=[
            pl.BlockSpec((c, tile_n), lambda s, i: (0, s * inner + i)),
            pl.BlockSpec((1, tile_n), lambda s, i: (0, s * inner + i)),
        ],
        out_specs=pl.BlockSpec((None, 4, 1), lambda s, i: (s, 0, 0)),
        scratch_shapes=[pltpu.VMEM((4, tile_n), jnp.float32)],
        compiler_params=pltpu.CompilerParams(
            dimension_semantics=("parallel", "arbitrary"),
            vmem_limit_bytes=32 * 1024 * 1024),
    )(x, t2d)

    # Exact associative combine of the per-split partial sums (4 scalars).
    tot = jnp.sum(partials[:, :, 0], axis=0)
    sum0, sum1, cnt0, cnt1 = tot[0], tot[1], tot[2], tot[3]
    # (mean over t==0) * (#t==1) + (mean over t==1) * (#t==0), all / N.
    # Produces NaN if a class is absent, matching torch's empty-slice mean().
    return (sum0 / cnt0 * cnt1 + sum1 / cnt1 * cnt0) / float(n)


def _reference(inputs, targets):
    # Pure-JAX reference reproducing the PyTorch module semantics.
    x = inputs.astype(jnp.float32)
    lse = jax.nn.logsumexp(x, axis=-1)
    picked = jnp.take_along_axis(x, targets[:, None].astype(jnp.int32), axis=-1)[:, 0]
    losses = lse - picked
    m0 = targets == 0
    m1 = targets == 1
    mean0 = jnp.sum(jnp.where(m0, losses, 0.0)) / jnp.sum(m0)
    mean1 = jnp.sum(jnp.where(m1, losses, 0.0)) / jnp.sum(m1)
    return (mean0 * jnp.sum(m1) + mean1 * jnp.sum(m0)) / targets.shape[0]


if __name__ == "__main__":
    key = jax.random.PRNGKey(0)

    # Small shape matching the module's (minibatch, classes) convention.
    N, C = 8, 4
    inputs = jax.random.normal(key, (N, C), dtype=jnp.float32)
    targets = (jnp.arange(N, dtype=jnp.int32) % 2).astype(jnp.int32)

    loss = weighted_cross_entropy(inputs, targets)
    jax.block_until_ready(loss)
    ref = _reference(inputs, targets)
    assert jnp.allclose(loss, ref, rtol=1e-4, atol=1e-5), (loss, ref)

    # Second check: bf16 logits, batch not a tile multiple (exercises padding,
    # both grid splits, and the in-kernel f32 cast).
    N2, C2 = 600, 6
    k1, _ = jax.random.split(key)
    inputs2 = jax.random.normal(k1, (N2, C2), dtype=jnp.float32).astype(jnp.bfloat16)
    targets2 = (jnp.arange(N2, dtype=jnp.int32) % 3 == 0).astype(jnp.int32)

    loss2 = weighted_cross_entropy(inputs2, targets2)
    jax.block_until_ready(loss2)
    ref2 = _reference(inputs2, targets2)
    assert jnp.allclose(loss2, ref2, rtol=1e-4, atol=1e-4), (loss2, ref2)

    print("KERNEL_OK")
</pallas_src>

<mosaic_0001>
module attributes {stable_mosaic.version = 11 : i64} {
  func.func @_weighted_ce_partial_kernel(%arg0: i32, %arg1: i32, %arg2: memref<4x128xf32, #tpu.memory_space<vmem>>, %arg3: memref<1x128xi32, #tpu.memory_space<vmem>>, %arg4: memref<1x4x1xf32, #tpu.memory_space<vmem>>, %arg5: memref<4x128xf32, #tpu.memory_space<vmem>>) attributes {dimension_semantics = [#tpu.dimension_semantics<parallel>, #tpu.dimension_semantics<arbitrary>], iteration_bounds = array<i64: 2, 1>, scalar_prefetch = 0 : i64, scratch_operands = 1 : i64, tpu.core_type = #tpu.core_type<tc>, window_params = [{transform_indices = @transform_0, window_bounds = array<i64: 4, 128>}, {transform_indices = @transform_1, window_bounds = array<i64: 1, 128>}, {transform_indices = @transform_2, window_bounds = array<i64: 1, 4, 1>}]} {
    %c0_i32 = arith.constant 0 : i32
    %0 = arith.cmpi eq, %arg1, %c0_i32 : i32
    %1 = arith.extui %0 : i1 to i32
    %c0_i32_0 = arith.constant 0 : i32
    %2 = arith.cmpi ne, %1, %c0_i32_0 : i32
    scf.if %2 {
      %cst_14 = arith.constant 0.000000e+00 : f32
      %39 = vector.broadcast %cst_14 : f32 to vector<4x128xf32>
      %c0_15 = arith.constant 0 : index
      %c0_16 = arith.constant 0 : index
      %40 = vector.load %arg5[%c0_15, %c0_16] : memref<4x128xf32, #tpu.memory_space<vmem>>, vector<4x128xf32>
      tpu.vector_store %arg5[%c0_15, %c0_16], %39 {strides = array<i32>} : memref<4x128xf32, #tpu.memory_space<vmem>>, vector<4x128xf32>,
    } else {
    }
    %c0 = arith.constant 0 : index
    %c0_1 = arith.constant 0 : index
    %3 = vector.load %arg2[%c0, %c0_1] : memref<4x128xf32, #tpu.memory_space<vmem>>, vector<4x128xf32>
    %c0_2 = arith.constant 0 : index
    %c0_3 = arith.constant 0 : index
    %4 = vector.load %arg3[%c0_2, %c0_3] : memref<1x128xi32, #tpu.memory_space<vmem>>, vector<1x128xi32>
    %cst = arith.constant dense<0xFF800000> : vector<128xf32>
    %5 = vector.multi_reduction <maximumf>, %3, %cst [0] : vector<4x128xf32> to vector<128xf32>
    %6 = vector.shape_cast %5 : vector<128xf32> to vector<1x128xf32>
    %7 = vector.broadcast %6 : vector<1x128xf32> to vector<4x128xf32>
    %8 = arith.subf %3, %7 : vector<4x128xf32>
    %9 = math.exp %8 : vector<4x128xf32>
    %cst_4 = arith.constant dense<0.000000e+00> : vector<128xf32>
    %10 = vector.multi_reduction <add>, %9, %cst_4 [0] : vector<4x128xf32> to vector<128xf32>
    %11 = vector.shape_cast %10 : vector<128xf32> to vector<1x128xf32>
    %12 = math.log %11 : vector<1x128xf32>
    %13 = arith.addf %6, %12 : vector<1x128xf32>
    %14 = tpu.iota {dimensions = array<i32: 0>} : vector<4x128xi32>
    %15 = vector.broadcast %4 : vector<1x128xi32> to vector<4x128xi32>
    %16 = arith.cmpi eq, %14, %15 : vector<4x128xi32>
    %cst_5 = arith.constant 0.000000e+00 : f32
    %17 = vector.broadcast %cst_5 : f32 to vector<4x128xf32>
    %18 = arith.select %16, %3, %17 : vector<4x128xi1>, vector<4x128xf32>
    %cst_6 = arith.constant dense<0.000000e+00> : vector<128xf32>
    %19 = vector.multi_reduction <add>, %18, %cst_6 [0] : vector<4x128xf32> to vector<128xf32>
    %20 = vector.shape_cast %19 : vector<128xf32> to vector<1x128xf32>
    %21 = arith.subf %13, %20 : vector<1x128xf32>
    %c0_i32_7 = arith.constant 0 : i32
    %22 = vector.broadcast %c0_i32_7 : i32 to vector<1x128xi32>
    %23 = arith.cmpi eq, %4, %22 : vector<1x128xi32>
    %24 = arith.extui %23 : vector<1x128xi1> to vector<1x128xi32>
    %25 = arith.sitofp %24 : vector<1x128xi32> to vector<1x128xf32>
    %c1_i32 = arith.constant 1 : i32
    %26 = vector.broadcast %c1_i32 : i32 to vector<1x128xi32>
    %27 = arith.cmpi eq, %4, %26 : vector<1x128xi32>
    %28 = arith.extui %27 : vector<1x128xi1> to vector<1x128xi32>
    %29 = arith.sitofp %28 : vector<1x128xi32> to vector<1x128xf32>
    %c0_8 = arith.constant 0 : index
    %c0_9 = arith.constant 0 : index
    %30 = vector.load %arg5[%c0_8, %c0_9] : memref<4x128xf32, #tpu.memory_space<vmem>>, vector<4x128xf32>
    %31 = arith.mulf %21, %25 : vector<1x128xf32>
    %32 = arith.mulf %21, %29 : vector<1x128xf32>
    %33 = tpu.concatenate %31, %32, %25, %29 in 0 : vector<1x128xf32>, vector<1x128xf32>, vector<1x128xf32>, vector<1x128xf32> -> vector<4x128xf32>
    %34 = arith.addf %30, %33 : vector<4x128xf32>
    %c0_10 = arith.constant 0 : index
    %c0_11 = arith.constant 0 : index
    %35 = vector.load %arg5[%c0_10, %c0_11] : memref<4x128xf32, #tpu.memory_space<vmem>>, vector<4x128xf32>
    tpu.vector_store %arg5[%c0_10, %c0_11], %34 {strides = array<i32>} : memref<4x128xf32, #tpu.memory_space<vmem>>, vector<4x128xf32>,
    %c0_i32_12 = arith.constant 0 : i32
    %36 = arith.cmpi eq, %arg1, %c0_i32_12 : i32
    %37 = arith.extui %36 : i1 to i32
    %c0_i32_13 = arith.constant 0 : i32
    %38 = arith.cmpi ne, %37, %c0_i32_13 : i32
    scf.if %38 {
      %c0_14 = arith.constant 0 : index
      %c0_15 = arith.constant 0 : index
      %39 = vector.load %arg5[%c0_14, %c0_15] : memref<4x128xf32, #tpu.memory_space<vmem>>, vector<4x128xf32>
      %cst_16 = arith.constant dense<0.000000e+00> : vector<4xf32>
      %40 = vector.multi_reduction <add>, %39, %cst_16 [1] : vector<4x128xf32> to vector<4xf32>
      %41 = vector.shape_cast %40 : vector<4xf32> to vector<4x1xf32>
      %c0_17 = arith.constant 0 : index
      %c0_18 = arith.constant 0 : index
      %c0_19 = arith.constant 0 : index
      %42 = vector.load %arg4[%c0_17, %c0_18, %c0_19] : memref<1x4x1xf32, #tpu.memory_space<vmem>>, vector<1x4x1xf32>
      %43 = vector.shape_cast %42 : vector<1x4x1xf32> to vector<4x1xf32>
      %44 = vector.shape_cast %41 : vector<4x1xf32> to vector<1x4x1xf32>
      tpu.vector_store %arg4[%c0_17, %c0_18, %c0_19], %44 {strides = array<i32>} : memref<1x4x1xf32, #tpu.memory_space<vmem>>, vector<1x4x1xf32>,
    } else {
    }
    return
  }
  func.func @transform_0(%arg0: i32, %arg1: i32) -> (i32, i32) {
    %c1_i32 = arith.constant 1 : i32
    %0 = arith.muli %arg0, %c1_i32 : i32
    %1 = arith.addi %0, %arg1 : i32
    %c0_i32 = arith.constant 0 : i32
    %c0_i32_0 = arith.constant 0 : i32
    return %c0_i32, %1 : i32, i32
  }
  func.func @transform_1(%arg0: i32, %arg1: i32) -> (i32, i32) {
    %c1_i32 = arith.constant 1 : i32
    %0 = arith.muli %arg0, %c1_i32 : i32
    %1 = arith.addi %0, %arg1 : i32
    %c0_i32 = arith.constant 0 : i32
    %c0_i32_0 = arith.constant 0 : i32
    return %c0_i32, %1 : i32, i32
  }
  func.func @transform_2(%arg0: i32, %arg1: i32) -> (i32, i32, i32) {
    %c0_i32 = arith.constant 0 : i32
    %c0_i32_0 = arith.constant 0 : i32
    %c0_i32_1 = arith.constant 0 : i32
    return %arg0, %c0_i32, %c0_i32_0 : i32, i32, i32
  }
}

</mosaic_0001>

<llo_original>
// kernel: tpu_custom_call.1
$region0: #{tpu_custom_call.1}
  #allocation0 [shape = 'u32[]', space=smem, size = 0x4, offset = 0x4, fixed_abs, tag = 'smem constant byte address 0x4 - core index']
  #allocation1 [shape = 'u32[144,128]{1,0:T(1,128)}', space=vmem, size = 0x12000, scoped, tag = 'internal scratch']
  #allocation2 [shape = 'f32[4,128]{1,0:T(4,128)}', space=vmem, size = 0x800, scoped, tag = 'scratch operand']
  %s0 = inlined_call_operand.hbm [shape: f32[4,256], index: 0, kind: input, shape index: {}]
  %s1 = inlined_call_operand.hbm [shape: s32[1,256], index: 1, kind: input, shape index: {}]
  %s2 = inlined_call_operand.vmem [shape: f32[2,4,1], index: 2, kind: output, shape index: {}]
  %s3 = sld [smem:[#allocation0]]
  $region57: #{tpu_custom_call.1} parent=0
    _
  %s5 = ssub.s32 1, %s3
  %s6 = scalar_select 0, %s5, %s3
  $region1: #{tpu_custom_call.1} parent=0
    #allocation3 [shape = 'u8[4096]{0}', space=vmem, size = 0x1000, scoped, tag = 'input window, operand 0']
    #allocation4 [shape = 's32[2]{0}', space=sflag, size = 0x8, scoped, tag = 'scoped memory for tpu_custom_call.1']
    #allocation5 [shape = 'u8[1024]{0}', space=vmem, size = 0x400, scoped, tag = 'input window, operand 1']
    #allocation6 [shape = 's32[2]{0}', space=sflag, size = 0x8, scoped, tag = 'scoped memory for tpu_custom_call.1']
    %7 = vsyncpa [#allocation4], 0
    %s8 = scalar_lea.sflag [#allocation4], 1
    %9 = vsyncpa %s8, 0
    %10 = vsyncpa [#allocation6], 0
    %s11 = scalar_lea.sflag [#allocation6], 1
    %12 = vsyncpa %s11, 0
    loop: start=0, step=1, limit=4
    $region2: #{tpu_custom_call.1} parent=1 // loop_pre_header
      _
    $region3: #{tpu_custom_call.1} parent=1 // loop_header
      %s14 = sphi 0, %s18
      %p15 = scmp.ge.s32.totalorder %s14, 4
      %s21 = sphi 0, %s33
      %s22 = sphi 0, %s29
      %s23 = sphi 0, %s21
      %s24 = sphi 0, %s22
      %s25 = sphi 0, %s23
      %s26 = sphi 0, %s24
      %s38 = sphi 0, %s40
      %s41 = sphi 0, %s38
      %s42 = sphi 0, %s41
      %s58 = sphi 0, %s42
      %s66 = sphi 0, %s68
      %s69 = sphi 0, %s66
      %s70 = sphi 0, %s69
      %s86 = sphi 0, %s70
      %s92 = sphi 0, %s94
      %s95 = sphi 0, %s92
      %s96 = sphi 0, %s95
      %s112 = sphi 0, %s96
    $region4: #{tpu_custom_call.1} parent=1 // loop_header_branch
      %17 = sbr.rel (%p15) target = $region8
    $region5: #{tpu_custom_call.1} parent=1 // loop_body
      %s19 = ssub.s32 %s14, 1
      %s20 = ssub.s32 %s14, 2
      %s27 = sadd.s32 1, %s22
      %p28 = scmp.ge.s32.totalorder %s27, 1
      %s29 = scalar_select %p28, 0, %s27
      %s30 = sadd.s32 1, %s21
      %s31 = scalar_select %p28, %s30, %s21
      %p32 = scmp.ge.s32.totalorder %s31, 2
      %s33 = scalar_select %p32, 0, %s31
      %s34 = sadd.s32 %s21, %s22
      %s35 = sadd.s32 %s33, %s29
      %s36 = ssub.s32 %s34, %s35
      %p37 = scmp.eq.s32.totalorder %s36, 0
      %s39 = sadd.s32 %s38, 1
      %s40 = scalar_select %p37, %s38, %s39
      %p43 = pneg %p37
      %p44 = scmp.eq.s32.totalorder %s14, 1
      %p45 = por %p43, %p44
      %p46 = scmp.ne.s32.totalorder %s38, %s41
      %p47 = scmp.eq.s32.totalorder %s14, 0
      %p48 = por %p46, %p47
      %p49 = scmp.ne.s32.totalorder %s38, %s41
      %p50 = scmp.eq.s32.totalorder %s19, 1
      %p51 = por %p49, %p50
      %p52 = scmp.ne.s32.totalorder %s41, %s42
      %p53 = scmp.eq.s32.totalorder %s19, 0
      %p54 = por %p52, %p53
      %p55 = scmp.ne.s32.totalorder %s41, %s42
      %p56 = scmp.eq.s32.totalorder %s20, 1
      %p57 = por %p55, %p56
      %p59 = scmp.ne.s32.totalorder %s42, %s58
      %p60 = scmp.eq.s32.totalorder %s20, 0
      %p61 = por %p59, %p60
      %s62 = sadd.s32 %s21, %s22
      %s63 = sadd.s32 %s33, %s29
      %s64 = ssub.s32 %s62, %s63
      %p65 = scmp.eq.s32.totalorder %s64, 0
      %s67 = sadd.s32 %s66, 1
      %s68 = scalar_select %p65, %s66, %s67
      %p71 = pneg %p65
      %p72 = scmp.eq.s32.totalorder %s14, 1
      %p73 = por %p71, %p72
      %p74 = scmp.ne.s32.totalorder %s66, %s69
      %p75 = scmp.eq.s32.totalorder %s14, 0
      %p76 = por %p74, %p75
      %p77 = scmp.ne.s32.totalorder %s66, %s69
      %p78 = scmp.eq.s32.totalorder %s19, 1
      %p79 = por %p77, %p78
      %p80 = scmp.ne.s32.totalorder %s69, %s70
      %p81 = scmp.eq.s32.totalorder %s19, 0
      %p82 = por %p80, %p81
      %p83 = scmp.ne.s32.totalorder %s69, %s70
      %p84 = scmp.eq.s32.totalorder %s20, 1
      %p85 = por %p83, %p84
      %p87 = scmp.ne.s32.totalorder %s70, %s86
      %p88 = scmp.eq.s32.totalorder %s20, 0
      %p89 = por %p87, %p88
      %s90 = ssub.s32 %s21, %s33
      %p91 = scmp.eq.s32.totalorder %s90, 0
      %s93 = sadd.s32 %s92, 1
      %s94 = scalar_select %p91, %s92, %s93
      %p97 = pneg %p91
      %p98 = scmp.eq.s32.totalorder %s14, 1
      %p99 = por %p97, %p98
      %p100 = scmp.ne.s32.totalorder %s92, %s95
      %p101 = scmp.eq.s32.totalorder %s14, 0
      %p102 = por %p100, %p101
      %p103 = scmp.ne.s32.totalorder %s92, %s95
      %p104 = scmp.eq.s32.totalorder %s19, 1
      %p105 = por %p103, %p104
      %p106 = scmp.ne.s32.totalorder %s95, %s96
      %p107 = scmp.eq.s32.totalorder %s19, 0
      %p108 = por %p106, %p107
      %p109 = scmp.ne.s32.totalorder %s95, %s96
      %p110 = scmp.eq.s32.totalorder %s20, 1
      %p111 = por %p109, %p110
      %p113 = scmp.ne.s32.totalorder %s96, %s112
      %p114 = scmp.eq.s32.totalorder %s20, 0
      %p115 = por %p113, %p114
      %p116 = scmp.le.s32.totalorder 1, %s14
      %p117 = scmp.lt.s32.totalorder %s14, 3
      %p118 = pnand %p116, %p117
      %p119 = pneg %p118
      // Predicated region
      $region9: #{tpu_custom_call.1} parent=5 // pred_check
        _
      $region10: #{tpu_custom_call.1} parent=5 // pred_check_branch
        %121 = sbr.rel (%p118) target = $region12
      $region11: #{tpu_custom_call.1} parent=5 // pred_region
        %s122 = ssub.s32 %s14, 1
      $region12: #{tpu_custom_call.1} parent=5 // pred_fallthru
        _
      %p123 = scmp.lt.s32.totalorder %s14, 2
      // Predicated region
      $region13: #{tpu_custom_call.1} parent=5 // pred_check
        %p124 = pneg %p123
      $region14: #{tpu_custom_call.1} parent=5 // pred_check_branch
        %126 = sbr.rel (%p124) target = $region16
      $region15: #{tpu_custom_call.1} parent=5 // pred_region
        // Predicated region
        $region17: #{tpu_custom_call.1} parent=15 // pred_check
          %p127 = pneg %p48
        $region18: #{tpu_custom_call.1} parent=15 // pred_check_branch
          %129 = sbr.rel (%p127) target = $region20
        $region19: #{tpu_custom_call.1} parent=15 // pred_region
          %s130 = sand.u32 %s38, 1
          %s131 = scalar_lea.sflag [#allocation4], %s130
          %s132 = sand.u32 %s38, 1
          %s133 = smul.addr %s132, 4
          %s134 = scalar_lea.vmem [#allocation3], %s133
          %s135 = sadd.s32 %s21, %s22
          %s137 = ssub.s32 64, 64
          %138 = vsyncadd %s131, %s137
          %s139 = smul.addr %s135, 64
          %s140 = scalar_lea.hbm %s0, %s139
          %s142 = sshll.u32 %s134, 4
          %s143 = int_to_ptr.vmem [resolvable:$true] %s142
          %145 = dma.hbm_to_vmem [thread:$0]  %s140, 64, %s143, %s131
        $region20: #{tpu_custom_call.1} parent=15 // pred_fallthru
          _
        // Predicated region
        $region21: #{tpu_custom_call.1} parent=15 // pred_check
          %p146 = pneg %p76
        $region22: #{tpu_custom_call.1} parent=15 // pred_check_branch
          %148 = sbr.rel (%p146) target = $region24
        $region23: #{tpu_custom_call.1} parent=15 // pred_region
          %s149 = sand.u32 %s66, 1
          %s150 = scalar_lea.sflag [#allocation6], %s149
          %s151 = sand.u32 %s66, 1
          %s152 = scalar_lea.vmem [#allocation5], %s151
          %s153 = sadd.s32 %s21, %s22
          %s155 = ssub.s32 16, 16
          %156 = vsyncadd %s150, %s155
          %s157 = smul.addr %s153, 16
          %s158 = scalar_lea.hbm %s1, %s157
          %s160 = sshll.u32 %s152, 4
          %s161 = int_to_ptr.vmem [resolvable:$true] %s160
          %163 = dma.hbm_to_vmem [thread:$0]  %s158, 16, %s161, %s150
        $region24: #{tpu_custom_call.1} parent=15 // pred_fallthru
          _
      $region16: #{tpu_custom_call.1} parent=5 // pred_fallthru
        _
      %p164 = scmp.le.s32.totalorder 1, %s14
      %p165 = scmp.lt.s32.totalorder %s14, 3
      %p166 = pnand %p164, %p165
      %p167 = pneg %p166
      // Predicated region
      $region25: #{tpu_custom_call.1} parent=5 // pred_check
        _
      $region26: #{tpu_custom_call.1} parent=5 // pred_check_branch
        %169 = sbr.rel (%p166) target = $region28
      $region27: #{tpu_custom_call.1} parent=5 // pred_region
        %s170 = ssub.s32 %s14, 1
        %s171 = sand.u32 %s41, 1
        %s172 = scalar_lea.sflag [#allocation4], %s171
        %s173 = sand.u32 %s41, 1
        %s174 = smul.addr %s173, 4
        %s175 = scalar_lea.vmem [#allocation3], %s174
        // Predicated region
        $region29: #{tpu_custom_call.1} parent=27 // pred_check
          %p176 = pneg %p54
        $region30: #{tpu_custom_call.1} parent=27 // pred_check_branch
          %178 = sbr.rel (%p176) target = $region32
        $region31: #{tpu_custom_call.1} parent=27 // pred_region
          %179 = dma.done %s172, 64
        $region32: #{tpu_custom_call.1} parent=27 // pred_fallthru
          _
        %s180 = sand.u32 %s69, 1
        %s181 = scalar_lea.sflag [#allocation6], %s180
        %s182 = sand.u32 %s69, 1
        %s183 = scalar_lea.vmem [#allocation5], %s182
        // Predicated region
        $region33: #{tpu_custom_call.1} parent=27 // pred_check
          %p184 = pneg %p82
        $region34: #{tpu_custom_call.1} parent=27 // pred_check_branch
          %186 = sbr.rel (%p184) target = $region36
        $region35: #{tpu_custom_call.1} parent=27 // pred_region
          %187 = dma.done %s181, 16
        $region36: #{tpu_custom_call.1} parent=27 // pred_fallthru
          _
        %s188 = sand.u32 %s41, 1
        %s189 = scalar_lea.sflag [#allocation4], %s188
        %s190 = sand.u32 %s41, 1
        %s191 = smul.addr %s190, 4
        %s192 = scalar_lea.vmem [#allocation3], %s191
        %p193 = pneg %p54
        %p194 = pneg %p51
        %s195 = sand.u32 %s69, 1
        %s196 = scalar_lea.sflag [#allocation6], %s195
        %s197 = sand.u32 %s69, 1
        %s198 = scalar_lea.vmem [#allocation5], %s197
        %p199 = pneg %p82
        %p200 = pneg %p79
        %p201 = pneg %p108
        %p202 = pneg %p105
        %p203 = scmp.lt.s32.totalorder %s23, 1
        %s204 = scalar_select %p203, %s23, 1
        %s205 = smul.addr %s204, 4
        %s206 = scalar_lea.vmem %s2, %s205
        %s207 = sadd.s32 %s23, %s24
        %s208 = sadd.s32 %s23, %s24
        %p209 = scmp.lt.s32.totalorder %s23, 1
        %s210 = scalar_select %p209, %s23, 1
        %s211 = smul.addr %s210, 4
        %s212 = scalar_lea.vmem %s2, %s211
        %p213 = scmp.eq.s32.totalorder %s24, 0
        // Predicated region
        $region37: #{tpu_custom_call.1} parent=27 // pred_check
          %p214 = pneg %p213
        $region38: #{tpu_custom_call.1} parent=27 // pred_check_branch
          %216 = sbr.rel (%p214) target = $region40
        $region39: #{tpu_custom_call.1} parent=27 // pred_region
          %217 = vst [vmem:[#allocation2] sm:$0xf] 0.0
        $region40: #{tpu_custom_call.1} parent=27 // pred_fallthru
          _
        %v218 = vld [vmem:[%s175] sm:$0xf]
        %v219 = vld [vmem:[%s183] sm:$0x1]
        %vm220 = vcmask 1043456
        %v221 = vsel %vm220, %v218, -inf
        %v222 = vrot.slane %v221, 4
        %v223 = vmax.f32 %v221, %v222
        %v224 = vrot.slane %v223, 2
        %v225 = vmax.f32 %v223, %v224
        %v226 = vrot.slane %v225, 1
        %v227 = vmax.f32 %v225, %v226
        %v228 = vsub.f32 %v218, %v227
        %v229 = vmul.f32 %v228, 1.442695
        %v230 = vpow.pop %v229
        %v231 = vsel %vm220, %v230, 0.0
        %v232 = vrot.slane %v231, 4
        %v233 = vadd.f32 %v231, %v232
        %v234 = vrot.slane %v233, 2
        %v235 = vadd.f32 %v233, %v234
        %v236 = vrot.slane %v235, 1
        %v237 = vadd.f32 %v235, %v236
        %v238 = vlog2.pop %v237
        %v239 = vmul.f32 %v238, 0.6931472
        %v240 = vadd.f32 %v227, %v239
        %v241 = vlaneseq
        %v242 = vshrl.u32 %v241, 7
        %v243 = vlaneseq
        %v244 = vshrl.u32 %v243, 7
        %v245 = vsub.s32 0, %v244
        %v246 = vrot.slane %v219, %v245
        %vm247 = vcmp.eq.s32.totalorder %v242, %v246
        %v248 = vsel %vm247, %v218, 0.0
        %v249 = vsel %vm220, %v248, 0.0
        %v250 = vrot.slane %v249, 4
        %v251 = vadd.f32 %v249, %v250
        %v252 = vrot.slane %v251, 2
        %v253 = vadd.f32 %v251, %v252
        %v254 = vrot.slane %v253, 1
        %v255 = vadd.f32 %v253, %v254
        %v256 = vsub.f32 %v240, %v255
        %vm257 = vcmp.eq.s32.totalorder %v219, 0
        %v258 = vsel %vm257, 1, 0
        %v259 = vcvt.s32.f32 %v258
        %vm260 = vcmp.eq.s32.totalorder %v219, 1
        %v261 = vsel %vm260, 1, 0
        %v262 = vcvt.s32.f32 %v261
        %v263 = vld [vmem:[#allocation2] sm:$0xf]
        %v264 = vmul.f32 %v256, %v259
        %v265 = vmul.f32 %v256, %v262
        %v267 = vrot.slane %v265, 7
        %v270 = vlaneseq
        %v271 = vshrl.u32 %v270, 7
        %v272 = vsub.s32 0, %v271
        %v273 = vrot.slane %v259, %v272
        %v276 = vlaneseq
        %v277 = vshrl.u32 %v276, 7
        %v278 = vsub.s32 0, %v277
        %v279 = vrot.slane %v262, %v278
        %vm281 = vcmask 1040384
        %v282 = vsel %vm281, %v264, %v267
        %vm283 = vcmask 1041408
        %v284 = vsel %vm283, %v282, %v273
        %vm285 = vcmask 1042432
        %v286 = vsel %vm285, %v284, %v279
        %v287 = vadd.f32 %v263, %v286
        %288 = vst [vmem:[#allocation2] sm:$0xf] %v287
        // Predicated region
        $region41: #{tpu_custom_call.1} parent=27 // pred_check
          %p289 = pneg %p213
        $region42: #{tpu_custom_call.1} parent=27 // pred_check_branch
          %291 = sbr.rel (%p289) target = $region44
        $region43: #{tpu_custom_call.1} parent=27 // pred_region
          %v292 = vld [vmem:[#allocation2] sm:$0xf]
          %v293 = vsel %vm220, %v292, 0.0
          %294 = vadd.xlane.f32.xlu0 %v293
          %v295 = vpop.xlane.xlu0 %294
          %vm296 = vcmask 3072
          %297 = vst.msk [vmem:[%s212] sm:$0xf] %vm296, %v295
        $region44: #{tpu_custom_call.1} parent=27 // pred_fallthru
          _
        %p298 = scmp.lt.s32.totalorder %s23, 1
        %s299 = scalar_select %p298, %s23, 1
        %s300 = smul.addr %s299, 4
        %s301 = scalar_lea.vmem %s2, %s300
        // Predicated region
        $region45: #{tpu_custom_call.1} parent=27 // pred_check
          %p302 = pneg %p105
        $region46: #{tpu_custom_call.1} parent=27 // pred_check_branch
          %304 = sbr.rel (%p302) target = $region48
        $region47: #{tpu_custom_call.1} parent=27 // pred_region
          _
        $region48: #{tpu_custom_call.1} parent=27 // pred_fallthru
          _
      $region28: #{tpu_custom_call.1} parent=5 // pred_fallthru
        _
      %p305 = scmp.le.s32.totalorder 2, %s14
      // Predicated region
      $region49: #{tpu_custom_call.1} parent=5 // pred_check
        %p306 = pneg %p305
      $region50: #{tpu_custom_call.1} parent=5 // pred_check_branch
        %308 = sbr.rel (%p306) target = $region52
      $region51: #{tpu_custom_call.1} parent=5 // pred_region
        %s309 = ssub.s32 %s14, 2
        // Predicated region
        $region53: #{tpu_custom_call.1} parent=51 // pred_check
          %p310 = pneg %p111
        $region54: #{tpu_custom_call.1} parent=51 // pred_check_branch
          %312 = sbr.rel (%p310) target = $region56
        $region55: #{tpu_custom_call.1} parent=51 // pred_region
          %p313 = scmp.lt.s32.totalorder %s25, 1
          %s314 = scalar_select %p313, %s25, 1
          %s315 = smul.addr %s314, 4
          %s316 = scalar_lea.vmem %s2, %s315
        $region56: #{tpu_custom_call.1} parent=51 // pred_fallthru
          _
      $region52: #{tpu_custom_call.1} parent=5 // pred_fallthru
        _
    $region6: #{tpu_custom_call.1} parent=1 // loop_footer
      %s18 = sadd.s32 1, %s14
    $region7: #{tpu_custom_call.1} parent=1 // loop_footer_branch
      %13 = sbr.rel target = $region3
    $region8: #{tpu_custom_call.1} parent=1 // loop_exit
      _
    %317 = vsyncpa [#allocation4], 1
    %s318 = scalar_lea.sflag [#allocation4], 1
    %319 = vsyncpa %s318, 1
    %320 = vsyncpa [#allocation6], 1
    %s321 = scalar_lea.sflag [#allocation6], 1
    %322 = vsyncpa %s321, 1

</llo_original>
